<compile_context>
chip_gen: v6e
topology: v6e:2x2x1
jax: 0.10.0
libtpu: 0.0.40
codegen_flags: <defaults>
</compile_context>

<pallas_src>
import jax
import jax.numpy as jnp
from jax.experimental import pallas as pl
from jax.experimental.pallas import tpu as pltpu

FEATURES = 1024                     # fixed by the module's gate shape (1, 1024)
_SMALL_FALLBACK_BYTES = 2 << 20     # below this, fused XLA elementwise wins
_VMEM_HEADROOM = 8 << 20


def _combine_latent_kernel(latent_ref, ladder_ref, gate_ref, out_ref):
    # Elementwise FMA in f32 (avoids double rounding vs. the f32 gate param);
    # gate (1, F) broadcasts over the (tile_b, F) activation tiles.
    lat = latent_ref[...].astype(jnp.float32)
    lad = ladder_ref[...].astype(jnp.float32)
    gate = gate_ref[...].astype(jnp.float32)
    out_ref[...] = (lat + gate * lad).astype(out_ref.dtype)


def _round_up(x, m):
    return (x + m - 1) // m * m


def _chip_info():
    """Return (tensorcores_per_chip, physical VMEM bytes per TensorCore)."""
    try:
        kind = jax.devices()[0].device_kind.lower()
    except Exception:
        kind = ""
    if "v7" in kind or "7x" in kind:
        return 2, 64 << 20
    if "v5" in kind or "v6" in kind:
        return 1, 128 << 20
    # Unknown chip: conservative VMEM; assume 2 TCs so large batches still get
    # split (costs at most one extra ~0.35 us grid step if wrong).
    return 2, 64 << 20


def _pick_tile_b(batch, itemsize, num_cores, phys_vmem):
    """Row-tile size: large tiles for the HBM roofline, double-buffered
    footprint comfortably under physical VMEM, balanced across v7x's 2 TCs."""
    max_tile_bytes = (8 << 20) if phys_vmem >= (128 << 20) else (4 << 20)
    rows_cap = max(8, (max_tile_bytes // (FEATURES * itemsize)) // 8 * 8)
    if batch <= rows_cap:
        if num_cores >= 2 and batch >= 512:
            # Split so both v7x TensorCores stream.
            return _round_up(pl.cdiv(batch, 2), 8)
        # Single block covering the full batch dim (always layout-legal).
        return batch
    n_steps = pl.cdiv(batch, rows_cap)
    if num_cores >= 2 and n_steps % num_cores != 0:
        # Even-length grid so the 2 TCs get equal row counts (no 512/88 split).
        n_steps = _round_up(n_steps, num_cores)
    return _round_up(pl.cdiv(batch, n_steps), 8)


def combine_latent(latent, ladder, gate, *, tile_b=None, donate_latent=False,
                   use_pallas=None):
    """Combine_latent forward: latent + gate * ladder.

    latent, ladder: (B, 1024); gate: (1, 1024) float32 parameter.
    """
    B, F = latent.shape
    assert F == FEATURES, f"feature dim must be {FEATURES}, got {F}"
    assert ladder.shape == (B, F)
    assert gate.shape == (1, F)

    itemsize = jnp.dtype(latent.dtype).itemsize

    if use_pallas is None:
        # Tiny problems: let XLA fuse the 3-op elementwise with its neighbors
        # (VLAE linear layers) instead of paying a standalone kernel launch
        # and an extra HBM round trip.
        use_pallas = 3 * B * F * itemsize > _SMALL_FALLBACK_BYTES
    if not use_pallas:
        out = (latent.astype(jnp.float32)
               + gate.astype(jnp.float32) * ladder.astype(jnp.float32))
        return out.astype(latent.dtype)

    num_cores, phys_vmem = _chip_info()
    if tile_b is None:
        tile_b = _pick_tile_b(B, itemsize, num_cores, phys_vmem)
    if tile_b != B and tile_b % 8 != 0:
        raise ValueError(
            f"tile_b={tile_b} must be a multiple of 8 or equal the batch {B}")

    grid = (pl.cdiv(B, tile_b),)

    # VMEM budget from the real footprint: 2 inputs + 1 output, each
    # double-buffered, plus the resident gate block.
    tile_bytes = tile_b * F * itemsize
    gate_bytes = F * jnp.dtype(gate.dtype).itemsize
    footprint = 3 * 2 * tile_bytes + 2 * gate_bytes
    if footprint + _VMEM_HEADROOM > phys_vmem:
        raise ValueError(
            f"tile_b={tile_b}: double-buffered VMEM footprint "
            f"{footprint >> 20} MiB + headroom exceeds physical VMEM "
            f"{phys_vmem >> 20} MiB on this chip")
    vmem_budget = int(min(footprint + _VMEM_HEADROOM, phys_vmem))

    cost = pl.CostEstimate(
        flops=2 * B * F,
        transcendentals=0,
        bytes_accessed=3 * B * F * itemsize + F * jnp.dtype(gate.dtype).itemsize,
    )

    extra_kwargs = {}
    if donate_latent:
        # NOTE: only saves the extra HBM buffer if the caller also donates
        # `latent` at the jit boundary (donate_argnums).
        extra_kwargs["input_output_aliases"] = {0: 0}

    return pl.pallas_call(
        _combine_latent_kernel,
        out_shape=jax.ShapeDtypeStruct((B, F), latent.dtype),
        grid_spec=pltpu.PrefetchScalarGridSpec(
            num_scalar_prefetch=0,
            grid=grid,
            in_specs=[
                pl.BlockSpec((tile_b, F), lambda i: (i, 0)),   # latent tile
                pl.BlockSpec((tile_b, F), lambda i: (i, 0)),   # ladder tile
                pl.BlockSpec((1, F), lambda i: (0, 0)),        # gate (resident)
            ],
            out_specs=pl.BlockSpec((tile_b, F), lambda i: (i, 0)),
        ),
        compiler_params=pltpu.CompilerParams(
            dimension_semantics=("parallel",),
            vmem_limit_bytes=vmem_budget,
        ),
        cost_estimate=cost,
        **extra_kwargs,
    )(latent, ladder, gate)


if __name__ == "__main__":
    key = jax.random.PRNGKey(0)

    # Deterministic parameter init, matching nn.init.constant_(self.gate, 0.1)
    gate = jnp.full((1, FEATURES), 0.1, dtype=jnp.float32)

    ok = True

    # Small batches -> auto-dispatch takes the fused-XLA fallback path.
    for B in (8, 100):
        k1, k2 = jax.random.split(jax.random.fold_in(key, B))
        latent = jax.random.normal(k1, (B, FEATURES), dtype=jnp.float32)
        ladder = jax.random.normal(k2, (B, FEATURES), dtype=jnp.float32)
        out = jax.block_until_ready(combine_latent(latent, ladder, gate))
        ref = latent + gate * ladder
        ok &= out.shape == (B, FEATURES)
        ok &= bool(jnp.allclose(out, ref, atol=1e-6, rtol=1e-6))

    # Force the Pallas path at a non-multiple-of-8 batch (single full block).
    B = 100
    k1, k2 = jax.random.split(jax.random.fold_in(key, 1000 + B))
    latent = jax.random.normal(k1, (B, FEATURES), dtype=jnp.float32)
    ladder = jax.random.normal(k2, (B, FEATURES), dtype=jnp.float32)
    out = jax.block_until_ready(
        combine_latent(latent, ladder, gate, use_pallas=True))
    ok &= bool(jnp.allclose(out, latent + gate * ladder, atol=1e-6, rtol=1e-6))

    # Pallas path with a multi-step grid and a partial (masked) last block.
    B = 777
    k1, k2 = jax.random.split(jax.random.fold_in(key, B))
    latent = jax.random.normal(k1, (B, FEATURES), dtype=jnp.float32)
    ladder = jax.random.normal(k2, (B, FEATURES), dtype=jnp.float32)
    out = jax.block_until_ready(combine_latent(latent, ladder, gate))
    ok &= bool(jnp.allclose(out, latent + gate * ladder, atol=1e-6, rtol=1e-6))

    # bf16 I/O (halves HBM bytes) with f32 FMA inside the kernel.
    B = 2048
    k1, k2 = jax.random.split(jax.random.fold_in(key, B))
    latent = jax.random.normal(k1, (B, FEATURES), dtype=jnp.bfloat16)
    ladder = jax.random.normal(k2, (B, FEATURES), dtype=jnp.bfloat16)
    out = jax.block_until_ready(combine_latent(latent, ladder, gate))
    ref = (latent.astype(jnp.float32)
           + gate * ladder.astype(jnp.float32)).astype(jnp.bfloat16)
    ok &= out.dtype == jnp.bfloat16
    ok &= bool(jnp.allclose(out.astype(jnp.float32), ref.astype(jnp.float32),
                            atol=1e-2, rtol=1e-2))

    assert ok, "mismatch vs reference"
    print("KERNEL_OK")
</pallas_src>

<mosaic_0001>
module attributes {stable_mosaic.version = 11 : i64} {
  func.func @_combine_latent_kernel(%arg0: i32, %arg1: memref<100x1024xf32, #tpu.memory_space<vmem>>, %arg2: memref<100x1024xf32, #tpu.memory_space<vmem>>, %arg3: memref<1x1024xf32, #tpu.memory_space<vmem>>, %arg4: memref<100x1024xf32, #tpu.memory_space<vmem>>) attributes {dimension_semantics = [#tpu.dimension_semantics<parallel>], iteration_bounds = array<i64: 1>, scalar_prefetch = 0 : i64, scratch_operands = 0 : i64, tpu.core_type = #tpu.core_type<tc>, window_params = [{transform_indices = @transform_0, window_bounds = array<i64: 100, 1024>}, {transform_indices = @transform_1, window_bounds = array<i64: 100, 1024>}, {pipeline_mode = #tpu.pipeline_mode<synchronous>, transform_indices = @transform_2, window_bounds = array<i64: 1, 1024>}, {transform_indices = @transform_3, window_bounds = array<i64: 100, 1024>}]} {
    %c0 = arith.constant 0 : index
    %c0_0 = arith.constant 0 : index
    %0 = vector.load %arg1[%c0, %c0_0] : memref<100x1024xf32, #tpu.memory_space<vmem>>, vector<100x1024xf32>
    %c0_1 = arith.constant 0 : index
    %c0_2 = arith.constant 0 : index
    %1 = vector.load %arg2[%c0_1, %c0_2] : memref<100x1024xf32, #tpu.memory_space<vmem>>, vector<100x1024xf32>
    %c0_3 = arith.constant 0 : index
    %c0_4 = arith.constant 0 : index
    %2 = vector.load %arg3[%c0_3, %c0_4] : memref<1x1024xf32, #tpu.memory_space<vmem>>, vector<1x1024xf32>
    %3 = vector.broadcast %2 : vector<1x1024xf32> to vector<100x1024xf32>
    %4 = arith.mulf %3, %1 : vector<100x1024xf32>
    %5 = arith.addf %0, %4 : vector<100x1024xf32>
    %c0_5 = arith.constant 0 : index
    %c0_6 = arith.constant 0 : index
    %6 = vector.load %arg4[%c0_5, %c0_6] : memref<100x1024xf32, #tpu.memory_space<vmem>>, vector<100x1024xf32>
    tpu.vector_store %arg4[%c0_5, %c0_6], %5 {strides = array<i32>} : memref<100x1024xf32, #tpu.memory_space<vmem>>, vector<100x1024xf32>,
    return
  }
  func.func @transform_0(%arg0: i32) -> (i32, i32) {
    %c0_i32 = arith.constant 0 : i32
    %c0_i32_0 = arith.constant 0 : i32
    return %arg0, %c0_i32 : i32, i32
  }
  func.func @transform_1(%arg0: i32) -> (i32, i32) {
    %c0_i32 = arith.constant 0 : i32
    %c0_i32_0 = arith.constant 0 : i32
    return %arg0, %c0_i32 : i32, i32
  }
  func.func @transform_2(%arg0: i32) -> (i32, i32) {
    %c0_i32 = arith.constant 0 : i32
    %c0_i32_0 = arith.constant 0 : i32
    %c0_i32_1 = arith.constant 0 : i32
    return %c0_i32, %c0_i32_0 : i32, i32
  }
  func.func @transform_3(%arg0: i32) -> (i32, i32) {
    %c0_i32 = arith.constant 0 : i32
    %c0_i32_0 = arith.constant 0 : i32
    return %arg0, %c0_i32 : i32, i32
  }
}

</mosaic_0001>

<llo_original>
// kernel: tpu_custom_call.1
$region0: #{tpu_custom_call.1}
  #allocation0 [shape = 'u32[]', space=smem, size = 0x4, offset = 0x4, fixed_abs, tag = 'smem constant byte address 0x4 - core index']
  #allocation1 [shape = 'u32[144,128]{1,0:T(1,128)}', space=vmem, size = 0x12000, scoped, tag = 'internal scratch']
  %s0 = inlined_call_operand.hbm [shape: f32[100,1024], index: 0, kind: input, shape index: {}]
  %s1 = inlined_call_operand.hbm [shape: f32[100,1024], index: 1, kind: input, shape index: {}]
  %s2 = inlined_call_operand.hbm [shape: f32[1,1024], index: 2, kind: input, shape index: {}]
  %s3 = inlined_call_operand.hbm [shape: f32[100,1024], index: 3, kind: output, shape index: {}]
  %s4 = sld [smem:[#allocation0]]
  $region34: #{tpu_custom_call.1} parent=0
    _
  %s6 = ssub.s32 1, %s4
  %s7 = scalar_select 0, %s6, %s4
  $region1: #{tpu_custom_call.1} parent=0
    #allocation2 [shape = 'u8[425984]{0}', space=vmem, size = 0x68000, scoped, tag = 'input window, operand 0, single buffered']
    #allocation3 [shape = 's32[1]{0}', space=sflag, size = 0x4, scoped, tag = 'scoped memory for tpu_custom_call.1']
    #allocation4 [shape = 's32[1]{0}', space=sflag, size = 0x4, scoped, tag = 'scoped memory for tpu_custom_call.1']
    #allocation5 [shape = 'u8[425984]{0}', space=vmem, size = 0x68000, scoped, tag = 'input window, operand 1, single buffered']
    #allocation6 [shape = 's32[1]{0}', space=sflag, size = 0x4, scoped, tag = 'scoped memory for tpu_custom_call.1']
    #allocation7 [shape = 'u8[4096]{0}', space=vmem, size = 0x1000, scoped, tag = 'input window, operand 2, single buffered']
    #allocation8 [shape = 'u8[425984]{0}', space=vmem, size = 0x68000, scoped, tag = 'output window, operand 0, single buffered']
    %8 = vsyncpa [#allocation3], 0
    %9 = vsyncpa [#allocation6], 0
    %10 = vsyncpa [#allocation4], 0
    // Predicated region
    $region2: #{tpu_custom_call.1} parent=1 // pred_check
      _
    $region3: #{tpu_custom_call.1} parent=1 // pred_check_branch
      %12 = sbr.rel (0) target = $region5
    $region4: #{tpu_custom_call.1} parent=1 // pred_region
      %s14 = ssub.s32 13312, 13312
      %15 = vsyncadd [#allocation3], %s14
      %s16 = sshll.u32 [#allocation2], 4
      %s17 = int_to_ptr.vmem [resolvable:$true] %s16
      %22 = dma.hbm_to_vmem [thread:$0]  %s0, 13312, %s17, [#allocation3], 1024, 1024, 64
    $region5: #{tpu_custom_call.1} parent=1 // pred_fallthru
      _
    // Predicated region
    $region6: #{tpu_custom_call.1} parent=1 // pred_check
      _
    $region7: #{tpu_custom_call.1} parent=1 // pred_check_branch
      %24 = sbr.rel (0) target = $region9
    $region8: #{tpu_custom_call.1} parent=1 // pred_region
      %s26 = ssub.s32 13312, 13312
      %27 = vsyncadd [#allocation6], %s26
      %s28 = sshll.u32 [#allocation5], 4
      %s29 = int_to_ptr.vmem [resolvable:$true] %s28
      %34 = dma.hbm_to_vmem [thread:$0]  %s1, 13312, %s29, [#allocation6], 1024, 1024, 64
    $region9: #{tpu_custom_call.1} parent=1 // pred_fallthru
      _
    // Predicated region
    $region10: #{tpu_custom_call.1} parent=1 // pred_check
      _
    $region11: #{tpu_custom_call.1} parent=1 // pred_check_branch
      %36 = sbr.rel (0) target = $region13
    $region12: #{tpu_custom_call.1} parent=1 // pred_region
      %s38 = ssub.s32 128, 128
      %39 = vsyncadd [#allocation6], %s38
      %s41 = sshll.u32 [#allocation7], 4
      %s42 = int_to_ptr.vmem [resolvable:$true] %s41
      %44 = dma.hbm_to_vmem [thread:$0]  %s2, 128, %s42, [#allocation6]
    $region13: #{tpu_custom_call.1} parent=1 // pred_fallthru
      _
    // Predicated region
    $region14: #{tpu_custom_call.1} parent=1 // pred_check
      _
    $region15: #{tpu_custom_call.1} parent=1 // pred_check_branch
      %46 = sbr.rel (0) target = $region17
    $region16: #{tpu_custom_call.1} parent=1 // pred_region
      %47 = dma.done [#allocation3], 13312
    $region17: #{tpu_custom_call.1} parent=1 // pred_fallthru
      _
    // Predicated region
    $region18: #{tpu_custom_call.1} parent=1 // pred_check
      _
    $region19: #{tpu_custom_call.1} parent=1 // pred_check_branch
      %49 = sbr.rel (0) target = $region21
    $region20: #{tpu_custom_call.1} parent=1 // pred_region
      %50 = dma.done [#allocation6], 13312
    $region21: #{tpu_custom_call.1} parent=1 // pred_fallthru
      _
    // Predicated region
    $region22: #{tpu_custom_call.1} parent=1 // pred_check
      _
    $region23: #{tpu_custom_call.1} parent=1 // pred_check_branch
      %52 = sbr.rel (0) target = $region25
    $region24: #{tpu_custom_call.1} parent=1 // pred_region
      %53 = dma.done [#allocation6], 128
    $region25: #{tpu_custom_call.1} parent=1 // pred_fallthru
      _
    %v54 = vld [vmem:[#allocation2] sm:$0xff]
    %v55 = vld [vmem:[#allocation2 + $0x8] sm:$0xff]
    %v56 = vld [vmem:[#allocation2 + $0x10] sm:$0xff]
    %v57 = vld [vmem:[#allocation2 + $0x18] sm:$0xff]
    %v58 = vld [vmem:[#allocation2 + $0x20] sm:$0xff]
    %v59 = vld [vmem:[#allocation2 + $0x28] sm:$0xff]
    %v60 = vld [vmem:[#allocation2 + $0x30] sm:$0xff]
    %v61 = vld [vmem:[#allocation2 + $0x38] sm:$0xff]
    %v62 = vld [vmem:[#allocation2 + $0x40] sm:$0xff]
    %v63 = vld [vmem:[#allocation2 + $0x48] sm:$0xff]
    %v64 = vld [vmem:[#allocation2 + $0x50] sm:$0xff]
    %v65 = vld [vmem:[#allocation2 + $0x58] sm:$0xff]
    %v66 = vld [vmem:[#allocation2 + $0x60] sm:$0xff]
    %v67 = vld [vmem:[#allocation2 + $0x68] sm:$0xff]
    %v68 = vld [vmem:[#allocation2 + $0x70] sm:$0xff]
    %v69 = vld [vmem:[#allocation2 + $0x78] sm:$0xff]
    %v70 = vld [vmem:[#allocation2 + $0x80] sm:$0xff]
    %v71 = vld [vmem:[#allocation2 + $0x88] sm:$0xff]
    %v72 = vld [vmem:[#allocation2 + $0x90] sm:$0xff]
    %v73 = vld [vmem:[#allocation2 + $0x98] sm:$0xff]
    %v74 = vld [vmem:[#allocation2 + $0xa0] sm:$0xff]
    %v75 = vld [vmem:[#allocation2 + $0xa8] sm:$0xff]
    %v76 = vld [vmem:[#allocation2 + $0xb0] sm:$0xff]
    %v77 = vld [vmem:[#allocation2 + $0xb8] sm:$0xff]
    %v78 = vld [vmem:[#allocation2 + $0xc0] sm:$0xff]
    %v79 = vld [vmem:[#allocation2 + $0xc8] sm:$0xff]
    %v80 = vld [vmem:[#allocation2 + $0xd0] sm:$0xff]
    %v81 = vld [vmem:[#allocation2 + $0xd8] sm:$0xff]
    %v82 = vld [vmem:[#allocation2 + $0xe0] sm:$0xff]
    %v83 = vld [vmem:[#allocation2 + $0xe8] sm:$0xff]
    %v84 = vld [vmem:[#allocation2 + $0xf0] sm:$0xff]
    %v85 = vld [vmem:[#allocation2 + $0xf8] sm:$0xff]
    %v86 = vld [vmem:[#allocation2 + $0x100] sm:$0xff]
    %v87 = vld [vmem:[#allocation2 + $0x108] sm:$0xff]
    %v88 = vld [vmem:[#allocation2 + $0x110] sm:$0xff]
    %v89 = vld [vmem:[#allocation2 + $0x118] sm:$0xff]
    %v90 = vld [vmem:[#allocation2 + $0x120] sm:$0xff]
    %v91 = vld [vmem:[#allocation2 + $0x128] sm:$0xff]
    %v92 = vld [vmem:[#allocation2 + $0x130] sm:$0xff]
    %v93 = vld [vmem:[#allocation2 + $0x138] sm:$0xff]
    %v94 = vld [vmem:[#allocation2 + $0x140] sm:$0xff]
    %v95 = vld [vmem:[#allocation2 + $0x148] sm:$0xff]
    %v96 = vld [vmem:[#allocation2 + $0x150] sm:$0xff]
    %v97 = vld [vmem:[#allocation2 + $0x158] sm:$0xff]
    %v98 = vld [vmem:[#allocation2 + $0x160] sm:$0xff]
    %v99 = vld [vmem:[#allocation2 + $0x168] sm:$0xff]
    %v100 = vld [vmem:[#allocation2 + $0x170] sm:$0xff]
    %v101 = vld [vmem:[#allocation2 + $0x178] sm:$0xff]
    %v102 = vld [vmem:[#allocation2 + $0x180] sm:$0xff]
    %v103 = vld [vmem:[#allocation2 + $0x188] sm:$0xff]
    %v104 = vld [vmem:[#allocation2 + $0x190] sm:$0xff]
    %v105 = vld [vmem:[#allocation2 + $0x198] sm:$0xff]
    %v106 = vld [vmem:[#allocation2 + $0x1a0] sm:$0xff]
    %v107 = vld [vmem:[#allocation2 + $0x1a8] sm:$0xff]
    %v108 = vld [vmem:[#allocation2 + $0x1b0] sm:$0xff]
    %v109 = vld [vmem:[#allocation2 + $0x1b8] sm:$0xff]
    %v110 = vld [vmem:[#allocation2 + $0x1c0] sm:$0xff]
    %v111 = vld [vmem:[#allocation2 + $0x1c8] sm:$0xff]
    %v112 = vld [vmem:[#allocation2 + $0x1d0] sm:$0xff]
    %v113 = vld [vmem:[#allocation2 + $0x1d8] sm:$0xff]
    %v114 = vld [vmem:[#allocation2 + $0x1e0] sm:$0xff]
    %v115 = vld [vmem:[#allocation2 + $0x1e8] sm:$0xff]
    %v116 = vld [vmem:[#allocation2 + $0x1f0] sm:$0xff]
    %v117 = vld [vmem:[#allocation2 + $0x1f8] sm:$0xff]
    %v118 = vld [vmem:[#allocation2 + $0x200] sm:$0xff]
    %v119 = vld [vmem:[#allocation2 + $0x208] sm:$0xff]
    %v120 = vld [vmem:[#allocation2 + $0x210] sm:$0xff]
    %v121 = vld [vmem:[#allocation2 + $0x218] sm:$0xff]
    %v122 = vld [vmem:[#allocation2 + $0x220] sm:$0xff]
    %v123 = vld [vmem:[#allocation2 + $0x228] sm:$0xff]
    %v124 = vld [vmem:[#allocation2 + $0x230] sm:$0xff]
    %v125 = vld [vmem:[#allocation2 + $0x238] sm:$0xff]
    %v126 = vld [vmem:[#allocation2 + $0x240] sm:$0xff]
    %v127 = vld [vmem:[#allocation2 + $0x248] sm:$0xff]
    %v128 = vld [vmem:[#allocation2 + $0x250] sm:$0xff]
    %v129 = vld [vmem:[#allocation2 + $0x258] sm:$0xff]
    %v130 = vld [vmem:[#allocation2 + $0x260] sm:$0xff]
    %v131 = vld [vmem:[#allocation2 + $0x268] sm:$0xff]
    %v132 = vld [vmem:[#allocation2 + $0x270] sm:$0xff]
    %v133 = vld [vmem:[#allocation2 + $0x278] sm:$0xff]
    %v134 = vld [vmem:[#allocation2 + $0x280] sm:$0xff]
    %v135 = vld [vmem:[#allocation2 + $0x288] sm:$0xff]
    %v136 = vld [vmem:[#allocation2 + $0x290] sm:$0xff]
    %v137 = vld [vmem:[#allocation2 + $0x298] sm:$0xff]
    %v138 = vld [vmem:[#allocation2 + $0x2a0] sm:$0xff]
    %v139 = vld [vmem:[#allocation2 + $0x2a8] sm:$0xff]
    %v140 = vld [vmem:[#allocation2 + $0x2b0] sm:$0xff]
    %v141 = vld [vmem:[#allocation2 + $0x2b8] sm:$0xff]
    %v142 = vld [vmem:[#allocation2 + $0x2c0] sm:$0xff]
    %v143 = vld [vmem:[#allocation2 + $0x2c8] sm:$0xff]
    %v144 = vld [vmem:[#allocation2 + $0x2d0] sm:$0xff]
    %v145 = vld [vmem:[#allocation2 + $0x2d8] sm:$0xff]
    %v146 = vld [vmem:[#allocation2 + $0x2e0] sm:$0xff]
    %v147 = vld [vmem:[#allocation2 + $0x2e8] sm:$0xff]
    %v148 = vld [vmem:[#allocation2 + $0x2f0] sm:$0xff]
    %v149 = vld [vmem:[#allocation2 + $0x2f8] sm:$0xff]
    %v150 = vld [vmem:[#allocation2 + $0x300] sm:$0xf]
    %v151 = vld [vmem:[#allocation2 + $0x308] sm:$0xf]
    %v152 = vld [vmem:[#allocation2 + $0x310] sm:$0xf]
    %v153 = vld [vmem:[#allocation2 + $0x318] sm:$0xf]
    %v154 = vld [vmem:[#allocation2 + $0x320] sm:$0xf]
    %v155 = vld [vmem:[#allocation2 + $0x328] sm:$0xf]
    %v156 = vld [vmem:[#allocation2 + $0x330] sm:$0xf]
    %v157 = vld [vmem:[#allocation2 + $0x338] sm:$0xf]
    %v158 = vld [vmem:[#allocation5] sm:$0xff]
    %v159 = vld [vmem:[#allocation5 + $0x8] sm:$0xff]
    %v160 = vld [vmem:[#allocation5 + $0x10] sm:$0xff]
    %v161 = vld [vmem:[#allocation5 + $0x18] sm:$0xff]
    %v162 = vld [vmem:[#allocation5 + $0x20] sm:$0xff]
    %v163 = vld [vmem:[#allocation5 + $0x28] sm:$0xff]
    %v164 = vld [vmem:[#allocation5 + $0x30] sm:$0xff]
    %v165 = vld [vmem:[#allocation5 + $0x38] sm:$0xff]
    %v166 = vld [vmem:[#allocation5 + $0x40] sm:$0xff]
    %v167 = vld [vmem:[#allocation5 + $0x48] sm:$0xff]
    %v168 = vld [vmem:[#allocation5 + $0x50] sm:$0xff]
    %v169 = vld [vmem:[#allocation5 + $0x58] sm:$0xff]
    %v170 = vld [vmem:[#allocation5 + $0x60] sm:$0xff]
    %v171 = vld [vmem:[#allocation5 + $0x68] sm:$0xff]
    %v172 = vld [vmem:[#allocation5 + $0x70] sm:$0xff]
    %v173 = vld [vmem:[#allocation5 + $0x78] sm:$0xff]
    %v174 = vld [vmem:[#allocation5 + $0x80] sm:$0xff]
    %v175 = vld [vmem:[#allocation5 + $0x88] sm:$0xff]
    %v176 = vld [vmem:[#allocation5 + $0x90] sm:$0xff]
    %v177 = vld [vmem:[#allocation5 + $0x98] sm:$0xff]
    %v178 = vld [vmem:[#allocation5 + $0xa0] sm:$0xff]
    %v179 = vld [vmem:[#allocation5 + $0xa8] sm:$0xff]
    %v180 = vld [vmem:[#allocation5 + $0xb0] sm:$0xff]
    %v181 = vld [vmem:[#allocation5 + $0xb8] sm:$0xff]
    %v182 = vld [vmem:[#allocation5 + $0xc0] sm:$0xff]
    %v183 = vld [vmem:[#allocation5 + $0xc8] sm:$0xff]
    %v184 = vld [vmem:[#allocation5 + $0xd0] sm:$0xff]
    %v185 = vld [vmem:[#allocation5 + $0xd8] sm:$0xff]
    %v186 = vld [vmem:[#allocation5 + $0xe0] sm:$0xff]
    %v187 = vld [vmem:[#allocation5 + $0xe8] sm:$0xff]
    %v188 = vld [vmem:[#allocation5 + $0xf0] sm:$0xff]
    %v189 = vld [vmem:[#allocation5 + $0xf8] sm:$0xff]
    %v190 = vld [vmem:[#allocation5 + $0x100] sm:$0xff]
    %v191 = vld [vmem:[#allocation5 + $0x108] sm:$0xff]
    %v192 = vld [vmem:[#allocation5 + $0x110] sm:$0xff]
    %v193 = vld [vmem:[#allocation5 + $0x118] sm:$0xff]
    %v194 = vld [vmem:[#allocation5 + $0x120] sm:$0xff]
    %v195 = vld [vmem:[#allocation5 + $0x128] sm:$0xff]
    %v196 = vld [vmem:[#allocation5 + $0x130] sm:$0xff]
    %v197 = vld [vmem:[#allocation5 + $0x138] sm:$0xff]
    %v198 = vld [vmem:[#allocation5 + $0x140] sm:$0xff]
    %v199 = vld [vmem:[#allocation5 + $0x148] sm:$0xff]
    %v200 = vld [vmem:[#allocation5 + $0x150] sm:$0xff]
    %v201 = vld [vmem:[#allocation5 + $0x158] sm:$0xff]
    %v202 = vld [vmem:[#allocation5 + $0x160] sm:$0xff]
    %v203 = vld [vmem:[#allocation5 + $0x168] sm:$0xff]
    %v204 = vld [vmem:[#allocation5 + $0x170] sm:$0xff]
    %v205 = vld [vmem:[#allocation5 + $0x178] sm:$0xff]
    %v206 = vld [vmem:[#allocation5 + $0x180] sm:$0xff]
    %v207 = vld [vmem:[#allocation5 + $0x188] sm:$0xff]
    %v208 = vld [vmem:[#allocation5 + $0x190] sm:$0xff]
    %v209 = vld [vmem:[#allocation5 + $0x198] sm:$0xff]
    %v210 = vld [vmem:[#allocation5 + $0x1a0] sm:$0xff]
    %v211 = vld [vmem:[#allocation5 + $0x1a8] sm:$0xff]
    %v212 = vld [vmem:[#allocation5 + $0x1b0] sm:$0xff]
    %v213 = vld [vmem:[#allocation5 + $0x1b8] sm:$0xff]
    %v214 = vld [vmem:[#allocation5 + $0x1c0] sm:$0xff]
    %v215 = vld [vmem:[#allocation5 + $0x1c8] sm:$0xff]
    %v216 = vld [vmem:[#allocation5 + $0x1d0] sm:$0xff]
    %v217 = vld [vmem:[#allocation5 + $0x1d8] sm:$0xff]
    %v218 = vld [vmem:[#allocation5 + $0x1e0] sm:$0xff]
    %v219 = vld [vmem:[#allocation5 + $0x1e8] sm:$0xff]
    %v220 = vld [vmem:[#allocation5 + $0x1f0] sm:$0xff]
    %v221 = vld [vmem:[#allocation5 + $0x1f8] sm:$0xff]
    %v222 = vld [vmem:[#allocation5 + $0x200] sm:$0xff]
    %v223 = vld [vmem:[#allocation5 + $0x208] sm:$0xff]
    %v224 = vld [vmem:[#allocation5 + $0x210] sm:$0xff]
    %v225 = vld [vmem:[#allocation5 + $0x218] sm:$0xff]
    %v226 = vld [vmem:[#allocation5 + $0x220] sm:$0xff]
    %v227 = vld [vmem:[#allocation5 + $0x228] sm:$0xff]
    %v228 = vld [vmem:[#allocation5 + $0x230] sm:$0xff]
    %v229 = vld [vmem:[#allocation5 + $0x238] sm:$0xff]
    %v230 = vld [vmem:[#allocation5 + $0x240] sm:$0xff]
    %v231 = vld [vmem:[#allocation5 + $0x248] sm:$0xff]
    %v232 = vld [vmem:[#allocation5 + $0x250] sm:$0xff]
    %v233 = vld [vmem:[#allocation5 + $0x258] sm:$0xff]
    %v234 = vld [vmem:[#allocation5 + $0x260] sm:$0xff]
    %v235 = vld [vmem:[#allocation5 + $0x268] sm:$0xff]
    %v236 = vld [vmem:[#allocation5 + $0x270] sm:$0xff]
    %v237 = vld [vmem:[#allocation5 + $0x278] sm:$0xff]
    %v238 = vld [vmem:[#allocation5 + $0x280] sm:$0xff]
    %v239 = vld [vmem:[#allocation5 + $0x288] sm:$0xff]
    %v240 = vld [vmem:[#allocation5 + $0x290] sm:$0xff]
    %v241 = vld [vmem:[#allocation5 + $0x298] sm:$0xff]
    %v242 = vld [vmem:[#allocation5 + $0x2a0] sm:$0xff]
    %v243 = vld [vmem:[#allocation5 + $0x2a8] sm:$0xff]
    %v244 = vld [vmem:[#allocation5 + $0x2b0] sm:$0xff]
    %v245 = vld [vmem:[#allocation5 + $0x2b8] sm:$0xff]
    %v246 = vld [vmem:[#allocation5 + $0x2c0] sm:$0xff]
    %v247 = vld [vmem:[#allocation5 + $0x2c8] sm:$0xff]
    %v248 = vld [vmem:[#allocation5 + $0x2d0] sm:$0xff]
    %v249 = vld [vmem:[#allocation5 + $0x2d8] sm:$0xff]
    %v250 = vld [vmem:[#allocation5 + $0x2e0] sm:$0xff]
    %v251 = vld [vmem:[#allocation5 + $0x2e8] sm:$0xff]
    %v252 = vld [vmem:[#allocation5 + $0x2f0] sm:$0xff]
    %v253 = vld [vmem:[#allocation5 + $0x2f8] sm:$0xff]
    %v254 = vld [vmem:[#allocation5 + $0x300] sm:$0xf]
    %v255 = vld [vmem:[#allocation5 + $0x308] sm:$0xf]
    %v256 = vld [vmem:[#allocation5 + $0x310] sm:$0xf]
    %v257 = vld [vmem:[#allocation5 + $0x318] sm:$0xf]
    %v258 = vld [vmem:[#allocation5 + $0x320] sm:$0xf]
    %v259 = vld [vmem:[#allocation5 + $0x328] sm:$0xf]
    %v260 = vld [vmem:[#allocation5 + $0x330] sm:$0xf]
    %v261 = vld [vmem:[#allocation5 + $0x338] sm:$0xf]
    %v262 = vld [vmem:[#allocation7] sm:$0xff]
    %v264 = vlaneseq
    %v265 = vshrl.u32 %v264, 7
    %v266 = vsub.s32 0, %v265
    %v267 = vrot.slane %v262, %v266
    %v268 = vlaneseq
    %v269 = vshrl.u32 %v268, 7
    %v270 = vsub.s32 1, %v269
    %v271 = vrot.slane %v262, %v270
    %v272 = vlaneseq
    %v273 = vshrl.u32 %v272, 7
    %v274 = vsub.s32 2, %v273
    %v275 = vrot.slane %v262, %v274
    %v276 = vlaneseq
    %v277 = vshrl.u32 %v276, 7
    %v278 = vsub.s32 3, %v277
    %v279 = vrot.slane %v262, %v278
    %v280 = vlaneseq
    %v281 = vshrl.u32 %v280, 7
    %v282 = vsub.s32 4, %v281
    %v283 = vrot.slane %v262, %v282
    %v284 = vlaneseq
    %v285 = vshrl.u32 %v284, 7
    %v286 = vsub.s32 5, %v285
    %v287 = vrot.slane %v262, %v286
    %v288 = vlaneseq
    %v289 = vshrl.u32 %v288, 7
    %v290 = vsub.s32 6, %v289
    %v291 = vrot.slane %v262, %v290
    %v292 = vlaneseq
    %v293 = vshrl.u32 %v292, 7
    %v294 = vsub.s32 7, %v293
    %v295 = vrot.slane %v262, %v294
    %v304 = vmul.f32 %v267, %v158
    %v305 = vmul.f32 %v271, %v159
    %v306 = vmul.f32 %v275, %v160
    %v307 = vmul.f32 %v279, %v161
    %v308 = vmul.f32 %v283, %v162
    %v309 = vmul.f32 %v287, %v163
    %v310 = vmul.f32 %v291, %v164
    %v311 = vmul.f32 %v295, %v165
    %v312 = vmul.f32 %v267, %v166
    %v313 = vmul.f32 %v271, %v167
    %v314 = vmul.f32 %v275, %v168
    %v315 = vmul.f32 %v279, %v169
    %v316 = vmul.f32 %v283, %v170
    %v317 = vmul.f32 %v287, %v171
    %v318 = vmul.f32 %v291, %v172
    %v319 = vmul.f32 %v295, %v173
    %v320 = vmul.f32 %v267, %v174
    %v321 = vmul.f32 %v271, %v175
    %v322 = vmul.f32 %v275, %v176
    %v323 = vmul.f32 %v279, %v177
    %v324 = vmul.f32 %v283, %v178
    %v325 = vmul.f32 %v287, %v179
    %v326 = vmul.f32 %v291, %v180
    %v327 = vmul.f32 %v295, %v181
    %v328 = vmul.f32 %v267, %v182
    %v329 = vmul.f32 %v271, %v183
    %v330 = vmul.f32 %v275, %v184
    %v331 = vmul.f32 %v279, %v185
    %v332 = vmul.f32 %v283, %v186
    %v333 = vmul.f32 %v287, %v187
    %v334 = vmul.f32 %v291, %v188
    %v335 = vmul.f32 %v295, %v189
    %v336 = vmul.f32 %v267, %v190
    %v337 = vmul.f32 %v271, %v191
    %v338 = vmul.f32 %v275, %v192
    %v339 = vmul.f32 %v279, %v193
    %v340 = vmul.f32 %v283, %v194
    %v341 = vmul.f32 %v287, %v195
    %v342 = vmul.f32 %v291, %v196
    %v343 = vmul.f32 %v295, %v197
    %v344 = vmul.f32 %v267, %v198
    %v345 = vmul.f32 %v271, %v199
    %v346 = vmul.f32 %v275, %v200
    %v347 = vmul.f32 %v279, %v201
    %v348 = vmul.f32 %v283, %v202
    %v349 = vmul.f32 %v287, %v203
    %v350 = vmul.f32 %v291, %v204
    %v351 = vmul.f32 %v295, %v205
    %v352 = vmul.f32 %v267, %v206
    %v353 = vmul.f32 %v271, %v207
    %v354 = vmul.f32 %v275, %v208
    %v355 = vmul.f32 %v279, %v209
    %v356 = vmul.f32 %v283, %v210
    %v357 = vmul.f32 %v287, %v211
    %v358 = vmul.f32 %v291, %v212
    %v359 = vmul.f32 %v295, %v213
    %v360 = vmul.f32 %v267, %v214
    %v361 = vmul.f32 %v271, %v215
    %v362 = vmul.f32 %v275, %v216
    %v363 = vmul.f32 %v279, %v217
    %v364 = vmul.f32 %v283, %v218
    %v365 = vmul.f32 %v287, %v219
    %v366 = vmul.f32 %v291, %v220
    %v367 = vmul.f32 %v295, %v221
    %v368 = vmul.f32 %v267, %v222
    %v369 = vmul.f32 %v271, %v223
    %v370 = vmul.f32 %v275, %v224
    %v371 = vmul.f32 %v279, %v225
    %v372 = vmul.f32 %v283, %v226
    %v373 = vmul.f32 %v287, %v227
    %v374 = vmul.f32 %v291, %v228
    %v375 = vmul.f32 %v295, %v229
    %v376 = vmul.f32 %v267, %v230
    %v377 = vmul.f32 %v271, %v231
    %v378 = vmul.f32 %v275, %v232
    %v379 = vmul.f32 %v279, %v233
    %v380 = vmul.f32 %v283, %v234
    %v381 = vmul.f32 %v287, %v235
    %v382 = vmul.f32 %v291, %v236
    %v383 = vmul.f32 %v295, %v237
    %v384 = vmul.f32 %v267, %v238
    %v385 = vmul.f32 %v271, %v239
    %v386 = vmul.f32 %v275, %v240
    %v387 = vmul.f32 %v279, %v241
    %v388 = vmul.f32 %v283, %v242
    %v389 = vmul.f32 %v287, %v243
    %v390 = vmul.f32 %v291, %v244
    %v391 = vmul.f32 %v295, %v245
    %v392 = vmul.f32 %v267, %v246
    %v393 = vmul.f32 %v271, %v247
    %v394 = vmul.f32 %v275, %v248
    %v395 = vmul.f32 %v279, %v249
    %v396 = vmul.f32 %v283, %v250
    %v397 = vmul.f32 %v287, %v251
    %v398 = vmul.f32 %v291, %v252
    %v399 = vmul.f32 %v295, %v253
    %v400 = vmul.f32 %v267, %v254
    %v401 = vmul.f32 %v271, %v255
    %v402 = vmul.f32 %v275, %v256
    %v403 = vmul.f32 %v279, %v257
    %v404 = vmul.f32 %v283, %v258
    %v405 = vmul.f32 %v287, %v259
    %v406 = vmul.f32 %v291, %v260
    %v407 = vmul.f32 %v295, %v261
    %v408 = vadd.f32 %v54, %v304
    %v409 = vadd.f32 %v55, %v305
    %v410 = vadd.f32 %v56, %v306
    %v411 = vadd.f32 %v57, %v307
    %v412 = vadd.f32 %v58, %v308
    %v413 = vadd.f32 %v59, %v309
    %v414 = vadd.f32 %v60, %v310
    %v415 = vadd.f32 %v61, %v311
    %v416 = vadd.f32 %v62, %v312
    %v417 = vadd.f32 %v63, %v313
    %v418 = vadd.f32 %v64, %v314
    %v419 = vadd.f32 %v65, %v315
    %v420 = vadd.f32 %v66, %v316
    %v421 = vadd.f32 %v67, %v317
    %v422 = vadd.f32 %v68, %v318
    %v423 = vadd.f32 %v69, %v319
    %v424 = vadd.f32 %v70, %v320
    %v425 = vadd.f32 %v71, %v321
    %v426 = vadd.f32 %v72, %v322
    %v427 = vadd.f32 %v73, %v323
    %v428 = vadd.f32 %v74, %v324
    %v429 = vadd.f32 %v75, %v325
    %v430 = vadd.f32 %v76, %v326
    %v431 = vadd.f32 %v77, %v327
    %v432 = vadd.f32 %v78, %v328
    %v433 = vadd.f32 %v79, %v329
    %v434 = vadd.f32 %v80, %v330
    %v435 = vadd.f32 %v81, %v331
    %v436 = vadd.f32 %v82, %v332
    %v437 = vadd.f32 %v83, %v333
    %v438 = vadd.f32 %v84, %v334
    %v439 = vadd.f32 %v85, %v335
    %v440 = vadd.f32 %v86, %v336
    %v441 = vadd.f32 %v87, %v337
    %v442 = vadd.f32 %v88, %v338
    %v443 = vadd.f32 %v89, %v339
    %v444 = vadd.f32 %v90, %v340
    %v445 = vadd.f32 %v91, %v341
    %v446 = vadd.f32 %v92, %v342
    %v447 = vadd.f32 %v93, %v343
    %v448 = vadd.f32 %v94, %v344
    %v449 = vadd.f32 %v95, %v345
    %v450 = vadd.f32 %v96, %v346
    %v451 = vadd.f32 %v97, %v347
    %v452 = vadd.f32 %v98, %v348
    %v453 = vadd.f32 %v99, %v349
    %v454 = vadd.f32 %v100, %v350
    %v455 = vadd.f32 %v101, %v351
    %v456 = vadd.f32 %v102, %v352
    %v457 = vadd.f32 %v103, %v353
    %v458 = vadd.f32 %v104, %v354
    %v459 = vadd.f32 %v105, %v355
    %v460 = vadd.f32 %v106, %v356
    %v461 = vadd.f32 %v107, %v357
    %v462 = vadd.f32 %v108, %v358
    %v463 = vadd.f32 %v109, %v359
    %v464 = vadd.f32 %v110, %v360
    %v465 = vadd.f32 %v111, %v361
    %v466 = vadd.f32 %v112, %v362
    %v467 = vadd.f32 %v113, %v363
    %v468 = vadd.f32 %v114, %v364
    %v469 = vadd.f32 %v115, %v365
    %v470 = vadd.f32 %v116, %v366
    %v471 = vadd.f32 %v117, %v367
    %v472 = vadd.f32 %v118, %v368
    %v473 = vadd.f32 %v119, %v369
    %v474 = vadd.f32 %v120, %v370
    %v475 = vadd.f32 %v121, %v371
    %v476 = vadd.f32 %v122, %v372
    %v477 = vadd.f32 %v123, %v373
    %v478 = vadd.f32 %v124, %v374
    %v479 = vadd.f32 %v125, %v375
    %v480 = vadd.f32 %v126, %v376
    %v481 = vadd.f32 %v127, %v377
    %v482 = vadd.f32 %v128, %v378
    %v483 = vadd.f32 %v129, %v379
    %v484 = vadd.f32 %v130, %v380
    %v485 = vadd.f32 %v131, %v381
    %v486 = vadd.f32 %v132, %v382
    %v487 = vadd.f32 %v133, %v383
    %v488 = vadd.f32 %v134, %v384
    %v489 = vadd.f32 %v135, %v385
    %v490 = vadd.f32 %v136, %v386
    %v491 = vadd.f32 %v137, %v387
    %v492 = vadd.f32 %v138, %v388
    %v493 = vadd.f32 %v139, %v389
    %v494 = vadd.f32 %v140, %v390
    %v495 = vadd.f32 %v141, %v391
    %v496 = vadd.f32 %v142, %v392
    %v497 = vadd.f32 %v143, %v393
    %v498 = vadd.f32 %v144, %v394
    %v499 = vadd.f32 %v145, %v395
    %v500 = vadd.f32 %v146, %v396
    %v501 = vadd.f32 %v147, %v397
    %v502 = vadd.f32 %v148, %v398
    %v503 = vadd.f32 %v149, %v399
    %v504 = vadd.f32 %v150, %v400
    %v505 = vadd.f32 %v151, %v401
    %v506 = vadd.f32 %v152, %v402
    %v507 = vadd.f32 %v153, %v403
    %v508 = vadd.f32 %v154, %v404
    %v509 = vadd.f32 %v155, %v405
    %v510 = vadd.f32 %v156, %v406
    %v511 = vadd.f32 %v157, %v407
    %512 = vst [vmem:[#allocation8] sm:$0xff] %v408
    %513 = vst [vmem:[#allocation8 + $0x8] sm:$0xff] %v409
    %514 = vst [vmem:[#allocation8 + $0x10] sm:$0xff] %v410
    %515 = vst [vmem:[#allocation8 + $0x18] sm:$0xff] %v411
    %516 = vst [vmem:[#allocation8 + $0x20] sm:$0xff] %v412
    %517 = vst [vmem:[#allocation8 + $0x28] sm:$0xff] %v413
    %518 = vst [vmem:[#allocation8 + $0x30] sm:$0xff] %v414
    %519 = vst [vmem:[#allocation8 + $0x38] sm:$0xff] %v415
    %520 = vst [vmem:[#allocation8 + $0x40] sm:$0xff] %v416
    %521 = vst [vmem:[#allocation8 + $0x48] sm:$0xff] %v417
    %522 = vst [vmem:[#allocation8 + $0x50] sm:$0xff] %v418
    %523 = vst [vmem:[#allocation8 + $0x58] sm:$0xff] %v419
    %524 = vst [vmem:[#allocation8 + $0x60] sm:$0xff] %v420
    %525 = vst [vmem:[#allocation8 + $0x68] sm:$0xff] %v421
    %526 = vst [vmem:[#allocation8 + $0x70] sm:$0xff] %v422
    %527 = vst [vmem:[#allocation8 + $0x78] sm:$0xff] %v423
    %528 = vst [vmem:[#allocation8 + $0x80] sm:$0xff] %v424
    %529 = vst [vmem:[#allocation8 + $0x88] sm:$0xff] %v425
    %530 = vst [vmem:[#allocation8 + $0x90] sm:$0xff] %v426
    %531 = vst [vmem:[#allocation8 + $0x98] sm:$0xff] %v427
    %532 = vst [vmem:[#allocation8 + $0xa0] sm:$0xff] %v428
    %533 = vst [vmem:[#allocation8 + $0xa8] sm:$0xff] %v429
    %534 = vst [vmem:[#allocation8 + $0xb0] sm:$0xff] %v430
    %535 = vst [vmem:[#allocation8 + $0xb8] sm:$0xff] %v431
    %536 = vst [vmem:[#allocation8 + $0xc0] sm:$0xff] %v432
    %537 = vst [vmem:[#allocation8 + $0xc8] sm:$0xff] %v433
    %538 = vst [vmem:[#allocation8 + $0xd0] sm:$0xff] %v434
    %539 = vst [vmem:[#allocation8 + $0xd8] sm:$0xff] %v435
    %540 = vst [vmem:[#allocation8 + $0xe0] sm:$0xff] %v436
    %541 = vst [vmem:[#allocation8 + $0xe8] sm:$0xff] %v437
    %542 = vst [vmem:[#allocation8 + $0xf0] sm:$0xff] %v438
    %543 = vst [vmem:[#allocation8 + $0xf8] sm:$0xff] %v439
    %544 = vst [vmem:[#allocation8 + $0x100] sm:$0xff] %v440
    %545 = vst [vmem:[#allocation8 + $0x108] sm:$0xff] %v441
    %546 = vst [vmem:[#allocation8 + $0x110] sm:$0xff] %v442
    %547 = vst [vmem:[#allocation8 + $0x118] sm:$0xff] %v443
    %548 = vst [vmem:[#allocation8 + $0x120] sm:$0xff] %v444
    %549 = vst [vmem:[#allocation8 + $0x128] sm:$0xff] %v445
    %550 = vst [vmem:[#allocation8 + $0x130] sm:$0xff] %v446
    %551 = vst [vmem:[#allocation8 + $0x138] sm:$0xff] %v447
    %552 = vst [vmem:[#allocation8 + $0x140] sm:$0xff] %v448
    %553 = vst [vmem:[#allocation8 + $0x148] sm:$0xff] %v449
    %554 = vst [vmem:[#allocation8 + $0x150] sm:$0xff] %v450
    %555 = vst [vmem:[#allocation8 + $0x158] sm:$0xff] %v451
    %556 = vst [vmem:[#allocation8 + $0x160] sm:$0xff] %v452
    %557 = vst [vmem:[#allocation8 + $0x168] sm:$0xff] %v453
    %558 = vst [vmem:[#allocation8 + $0x170] sm:$0xff] %v454
    %559 = vst [vmem:[#allocation8 + $0x178] sm:$0xff] %v455
    %560 = vst [vmem:[#allocation8 + $0x180] sm:$0xff] %v456
    %561 = vst [vmem:[#allocation8 + $0x188] sm:$0xff] %v457
    %562 = vst [vmem:[#allocation8 + $0x190] sm:$0xff] %v458
    %563 = vst [vmem:[#allocation8 + $0x198] sm:$0xff] %v459
    %564 = vst [vmem:[#allocation8 + $0x1a0] sm:$0xff] %v460
    %565 = vst [vmem:[#allocation8 + $0x1a8] sm:$0xff] %v461
    %566 = vst [vmem:[#allocation8 + $0x1b0] sm:$0xff] %v462
    %567 = vst [vmem:[#allocation8 + $0x1b8] sm:$0xff] %v463
    %568 = vst [vmem:[#allocation8 + $0x1c0] sm:$0xff] %v464
    %569 = vst [vmem:[#allocation8 + $0x1c8] sm:$0xff] %v465
    %570 = vst [vmem:[#allocation8 + $0x1d0] sm:$0xff] %v466
    %571 = vst [vmem:[#allocation8 + $0x1d8] sm:$0xff] %v467
    %572 = vst [vmem:[#allocation8 + $0x1e0] sm:$0xff] %v468
    %573 = vst [vmem:[#allocation8 + $0x1e8] sm:$0xff] %v469
    %574 = vst [vmem:[#allocation8 + $0x1f0] sm:$0xff] %v470
    %575 = vst [vmem:[#allocation8 + $0x1f8] sm:$0xff] %v471
    %576 = vst [vmem:[#allocation8 + $0x200] sm:$0xff] %v472
    %577 = vst [vmem:[#allocation8 + $0x208] sm:$0xff] %v473
    %578 = vst [vmem:[#allocation8 + $0x210] sm:$0xff] %v474
    %579 = vst [vmem:[#allocation8 + $0x218] sm:$0xff] %v475
    %580 = vst [vmem:[#allocation8 + $0x220] sm:$0xff] %v476
    %581 = vst [vmem:[#allocation8 + $0x228] sm:$0xff] %v477
    %582 = vst [vmem:[#allocation8 + $0x230] sm:$0xff] %v478
    %583 = vst [vmem:[#allocation8 + $0x238] sm:$0xff] %v479
    %584 = vst [vmem:[#allocation8 + $0x240] sm:$0xff] %v480
    %585 = vst [vmem:[#allocation8 + $0x248] sm:$0xff] %v481
    %586 = vst [vmem:[#allocation8 + $0x250] sm:$0xff] %v482
    %587 = vst [vmem:[#allocation8 + $0x258] sm:$0xff] %v483
    %588 = vst [vmem:[#allocation8 + $0x260] sm:$0xff] %v484
    %589 = vst [vmem:[#allocation8 + $0x268] sm:$0xff] %v485
    %590 = vst [vmem:[#allocation8 + $0x270] sm:$0xff] %v486
    %591 = vst [vmem:[#allocation8 + $0x278] sm:$0xff] %v487
    %592 = vst [vmem:[#allocation8 + $0x280] sm:$0xff] %v488
    %593 = vst [vmem:[#allocation8 + $0x288] sm:$0xff] %v489
    %594 = vst [vmem:[#allocation8 + $0x290] sm:$0xff] %v490
    %595 = vst [vmem:[#allocation8 + $0x298] sm:$0xff] %v491
    %596 = vst [vmem:[#allocation8 + $0x2a0] sm:$0xff] %v492
    %597 = vst [vmem:[#allocation8 + $0x2a8] sm:$0xff] %v493
    %598 = vst [vmem:[#allocation8 + $0x2b0] sm:$0xff] %v494
    %599 = vst [vmem:[#allocation8 + $0x2b8] sm:$0xff] %v495
    %600 = vst [vmem:[#allocation8 + $0x2c0] sm:$0xff] %v496
    %601 = vst [vmem:[#allocation8 + $0x2c8] sm:$0xff] %v497
    %602 = vst [vmem:[#allocation8 + $0x2d0] sm:$0xff] %v498
    %603 = vst [vmem:[#allocation8 + $0x2d8] sm:$0xff] %v499
    %604 = vst [vmem:[#allocation8 + $0x2e0] sm:$0xff] %v500
    %605 = vst [vmem:[#allocation8 + $0x2e8] sm:$0xff] %v501
    %606 = vst [vmem:[#allocation8 + $0x2f0] sm:$0xff] %v502
    %607 = vst [vmem:[#allocation8 + $0x2f8] sm:$0xff] %v503
    %608 = vst [vmem:[#allocation8 + $0x300] sm:$0xf] %v504
    %609 = vst [vmem:[#allocation8 + $0x308] sm:$0xf] %v505
    %610 = vst [vmem:[#allocation8 + $0x310] sm:$0xf] %v506
    %611 = vst [vmem:[#allocation8 + $0x318] sm:$0xf] %v507
    %612 = vst [vmem:[#allocation8 + $0x320] sm:$0xf] %v508
    %613 = vst [vmem:[#allocation8 + $0x328] sm:$0xf] %v509
    %614 = vst [vmem:[#allocation8 + $0x330] sm:$0xf] %v510
    %615 = vst [vmem:[#allocation8 + $0x338] sm:$0xf] %v511
    // Predicated region
    $region26: #{tpu_custom_call.1} parent=1 // pred_check
      _
    $region27: #{tpu_custom_call.1} parent=1 // pred_check_branch
      %617 = sbr.rel (0) target = $region29
    $region28: #{tpu_custom_call.1} parent=1 // pred_region
      %s619 = ssub.s32 13312, 13312
      %620 = vsyncadd [#allocation4], %s619
      %s621 = sshll.u32 [#allocation8], 4
      %s622 = int_to_ptr.vmem [resolvable:$true] %s621
      %627 = dma.vmem_to_hbm [thread:$0]  %s622, 13312, %s3, [#allocation4], 1024, 1024, 64
    $region29: #{tpu_custom_call.1} parent=1 // pred_fallthru
      _
    // Predicated region
    $region30: #{tpu_custom_call.1} parent=1 // pred_check
      _
    $region31: #{tpu_custom_call.1} parent=1 // pred_check_branch
      %629 = sbr.rel (0) target = $region33
    $region32: #{tpu_custom_call.1} parent=1 // pred_region
      %630 = dma.done [#allocation4], 13312
    $region33: #{tpu_custom_call.1} parent=1 // pred_fallthru
      _
    %631 = vsyncpa [#allocation3], 1
    %632 = vsyncpa [#allocation6], 1
    %633 = vsyncpa [#allocation4], 1

</llo_original>
